<compile_context>
chip_gen: v7x
topology: tpu7x:2x2x1
jax: 0.10.0
libtpu: 0.0.40
codegen_flags: <defaults>
</compile_context>

<pallas_src>
import functools

import jax
import jax.numpy as jnp
from jax import lax
from jax.experimental import pallas as pl
from jax.experimental.pallas import tpu as pltpu


def _pick_tile(dim: int, candidates=(512, 256, 128)) -> int:
    """Largest lane-aligned tile that evenly divides `dim`, else the full dim."""
    for c in candidates:
        if dim >= c and dim % c == 0:
            return c
    return dim


def _i32(v: int):
    """uint32 literal -> int32 constant with the identical bit pattern."""
    return jnp.int32(v - (1 << 32) if v >= (1 << 31) else v)


def _mix32(h):
    """splitmix32-style avalanche over int32 bit patterns (pure VPU ops)."""
    h = (h ^ lax.shift_right_logical(h, 16)) * _i32(0x7FEB352D)
    h = (h ^ lax.shift_right_logical(h, 15)) * _i32(0x846CA68B)
    h = h ^ lax.shift_right_logical(h, 16)
    return h


def _linear_bn_relu_dropout_kernel(
    seed_ref,    # (1,)      SMEM  int32 dropout seed (scalar prefetch)
    x_ref,       # (B, TK)   VMEM
    wt_ref,      # (TK, TN)  VMEM  weight pre-transposed to (Cin, Cout)
    b_ref,       # (1, TN)   VMEM
    gamma_ref,   # (1, TN)   VMEM
    beta_ref,    # (1, TN)   VMEM
    o_ref,       # (B, TN)   VMEM
    acc_ref,     # (B, TN)   VMEM  f32 accumulator scratch
    *,
    batch: int,
    nk: int,         # static number of K (reduction) steps
    tn: int,         # static output-column tile width
    training: bool,
    eps: float,
    drop_p: float,
):
    # Grid primitives and scalar reads are bound at the TOP LEVEL of the
    # kernel — never inside pl.when bodies (branch jaxprs are reused verbatim
    # and un-substituted program_id breaks lowering/interpretation).
    j = pl.program_id(0)          # output-column tile index (parallel axis)
    k = pl.program_id(1)          # reduction step (arbitrary axis)
    col_base = j * tn             # global column offset of this output tile
    seed = seed_ref[0]

    # ---- init accumulator on the first K step ----
    @pl.when(k == 0)
    def _():
        acc_ref[...] = jnp.zeros_like(acc_ref)

    # ---- Linear: stream K tiles through the MXU, accumulate in f32 ----
    acc_ref[...] += jnp.dot(x_ref[...], wt_ref[...],
                            preferred_element_type=jnp.float32)

    # ---- epilogue on the last K step: bias + BN + ReLU + dropout ----
    @pl.when(k == nk - 1)
    def _():
        y = acc_ref[...] + b_ref[...].astype(jnp.float32)

        if batch != 1:  # static shape check, mirrors `if x.shape[0] != 1`
            # BatchNorm1d (training): biased batch statistics per feature.
            mean = jnp.mean(y, axis=0, keepdims=True)
            var = jnp.mean(jnp.square(y - mean), axis=0, keepdims=True)
            y = (y - mean) * lax.rsqrt(var + eps)
            y = (y * gamma_ref[...].astype(jnp.float32)
                 + beta_ref[...].astype(jnp.float32))

        y = jnp.maximum(y, 0.0)  # ReLU

        if training and drop_p > 0.0:
            # Stateless hash PRNG keyed by (seed, row, global column).
            # All arithmetic is int32 with logical shifts -> safe on Mosaic
            # and under interpret mode; wraps like uint32 bit-wise.
            bsz, cols = y.shape
            row = lax.broadcasted_iota(jnp.int32, (bsz, cols), 0)
            col = lax.broadcasted_iota(jnp.int32, (bsz, cols), 1) + col_base
            h = seed * _i32(0x9E3779B9)
            h = h ^ (row * _i32(0x85EBCA6B)) ^ (col * _i32(0xC2B2AE35))
            h = _mix32(h)
            r24 = lax.shift_right_logical(h, 8)       # uniform in [0, 2^24)
            thr = jnp.int32(int(drop_p * (1 << 24)))
            keep = r24 >= thr                          # P(keep) = 1 - drop_p
            y = jnp.where(keep, y * (1.0 / (1.0 - drop_p)), 0.0)

        o_ref[...] = y.astype(o_ref.dtype)


def linear_module_forward(x, weight_t, bias, gamma, beta, seed, *,
                          training=True, drop_p=0.5, eps=1e-5):
    """Forward pass of the PyTorch `Linear` module.

    x:        (B, Cin)
    weight_t: (Cin, Cout)  -- nn.Linear weight, transposed ONCE at param-prep
                              time (not inside the per-call forward path).
    bias, gamma, beta: (Cout,)
    """
    B, Cin = x.shape
    cin_w, Cout = weight_t.shape
    assert cin_w == Cin, "weight_t must be (Cin, Cout)"

    tn = _pick_tile(Cout)           # lane-dense output tile (multiple of 128)
    tk = _pick_tile(Cin)            # reduction tile
    grid = (Cout // tn, Cin // tk)  # (parallel Cout tiles, arbitrary K tiles)
    nk = grid[1]

    b2 = bias.reshape(1, Cout)
    g2 = gamma.reshape(1, Cout)
    be2 = beta.reshape(1, Cout)
    seed_arr = jnp.asarray([seed], dtype=jnp.int32)

    kernel = functools.partial(
        _linear_bn_relu_dropout_kernel,
        batch=B, nk=nk, tn=tn, training=training, eps=eps, drop_p=drop_p)

    return pl.pallas_call(
        kernel,
        out_shape=jax.ShapeDtypeStruct((B, Cout), x.dtype),
        grid_spec=pltpu.PrefetchScalarGridSpec(
            num_scalar_prefetch=1,
            grid=grid,
            in_specs=[
                pl.BlockSpec((B, tk), lambda j, k, seed: (0, k)),    # x
                pl.BlockSpec((tk, tn), lambda j, k, seed: (k, j)),   # W^T
                pl.BlockSpec((1, tn), lambda j, k, seed: (0, j)),    # bias
                pl.BlockSpec((1, tn), lambda j, k, seed: (0, j)),    # gamma
                pl.BlockSpec((1, tn), lambda j, k, seed: (0, j)),    # beta
            ],
            out_specs=pl.BlockSpec((B, tn), lambda j, k, seed: (0, j)),
            scratch_shapes=[pltpu.VMEM((B, tn), jnp.float32)],
        ),
        compiler_params=pltpu.CompilerParams(
            # Cout tiles are independent -> shard across TensorCores (v7x);
            # the Cin axis is a reduction into the accumulator -> arbitrary.
            dimension_semantics=("parallel", "arbitrary"),
            # Double-buffered <=512-wide f32 tiles fit with large headroom on
            # v5e/v6e (128 MiB VMEM) and v7x (64 MiB physical).
            vmem_limit_bytes=32 * 1024 * 1024,
        ),
    )(seed_arr, x, weight_t, b2, g2, be2)


if __name__ == "__main__":
    # Small deterministic setup consistent with Linear(in_channels, out_channels).
    # Sizes chosen so both grid axes have >1 step (exercises tiling + accum).
    B, Cin, Cout = 8, 384, 768

    key = jax.random.PRNGKey(0)
    k_x, k_w, k_b = jax.random.split(key, 3)

    x = jax.random.normal(k_x, (B, Cin), dtype=jnp.float32)

    # PyTorch-style init: uniform(-1/sqrt(fan_in), 1/sqrt(fan_in)).
    bound = 1.0 / (Cin ** 0.5)
    weight = jax.random.uniform(k_w, (Cout, Cin), jnp.float32, -bound, bound)
    bias = jax.random.uniform(k_b, (Cout,), jnp.float32, -bound, bound)
    gamma = jnp.ones((Cout,), jnp.float32)   # BatchNorm1d weight init
    beta = jnp.zeros((Cout,), jnp.float32)   # BatchNorm1d bias init

    # Transpose the weight ONCE at parameter-prep time (kept out of forward).
    weight_t = jnp.asarray(weight.T)

    out = linear_module_forward(x, weight_t, bias, gamma, beta, seed=1234,
                                training=True)
    out = jax.block_until_ready(out)

    # ---- checks against a pure-JAX reference of the deterministic part ----
    y = jnp.dot(x, weight.T, precision=jax.lax.Precision.HIGHEST) + bias
    mean = jnp.mean(y, axis=0, keepdims=True)
    var = jnp.mean((y - mean) ** 2, axis=0, keepdims=True)
    y = (y - mean) * jax.lax.rsqrt(var + 1e-5) * gamma + beta
    y_ref = jnp.maximum(y, 0.0)

    assert out.shape == (B, Cout)
    assert bool(jnp.all(jnp.isfinite(out)))
    assert bool(jnp.all(out >= 0.0))  # post-ReLU/dropout must be non-negative
    # Every element is either dropped (exactly 0) or kept (2 * y_ref).
    elem_err = jnp.minimum(jnp.abs(out), jnp.abs(out - 2.0 * y_ref))
    assert float(jnp.max(elem_err)) < 5e-3

    print("KERNEL_OK")
</pallas_src>

<mosaic_0001>
module attributes {stable_mosaic.version = 11 : i64} {
  func.func @_linear_bn_relu_dropout_kernel(%arg0: i32, %arg1: i32, %arg2: memref<1xi32, #tpu.memory_space<smem>>, %arg3: memref<8x128xf32, #tpu.memory_space<vmem>>, %arg4: memref<128x256xf32, #tpu.memory_space<vmem>>, %arg5: memref<1x256xf32, #tpu.memory_space<vmem>>, %arg6: memref<1x256xf32, #tpu.memory_space<vmem>>, %arg7: memref<1x256xf32, #tpu.memory_space<vmem>>, %arg8: memref<8x256xf32, #tpu.memory_space<vmem>>, %arg9: memref<8x256xf32, #tpu.memory_space<vmem>>) attributes {dimension_semantics = [#tpu.dimension_semantics<parallel>, #tpu.dimension_semantics<arbitrary>], iteration_bounds = array<i64: 3, 3>, scalar_prefetch = 1 : i64, scratch_operands = 1 : i64, tpu.core_type = #tpu.core_type<tc>, window_params = [{transform_indices = @transform_0, window_bounds = array<i64: 8, 128>}, {transform_indices = @transform_1, window_bounds = array<i64: 128, 256>}, {transform_indices = @transform_2, window_bounds = array<i64: 1, 256>}, {transform_indices = @transform_3, window_bounds = array<i64: 1, 256>}, {transform_indices = @transform_4, window_bounds = array<i64: 1, 256>}, {transform_indices = @transform_5, window_bounds = array<i64: 8, 256>}]} {
    %c256_i32 = arith.constant 256 : i32
    %0 = arith.muli %arg0, %c256_i32 : i32
    %c0 = arith.constant 0 : index
    %1 = memref.load %arg2[%c0] : memref<1xi32, #tpu.memory_space<smem>>
    %c0_i32 = arith.constant 0 : i32
    %2 = arith.cmpi eq, %arg1, %c0_i32 : i32
    %3 = arith.extui %2 : i1 to i32
    %c0_i32_0 = arith.constant 0 : i32
    %4 = arith.cmpi ne, %3, %c0_i32_0 : i32
    scf.if %4 {
      %cst_10 = arith.constant 0.000000e+00 : f32
      %14 = vector.broadcast %cst_10 : f32 to vector<8x256xf32>
      %c0_11 = arith.constant 0 : index
      %c0_12 = arith.constant 0 : index
      %15 = vector.load %arg9[%c0_11, %c0_12] : memref<8x256xf32, #tpu.memory_space<vmem>>, vector<8x256xf32>
      tpu.vector_store %arg9[%c0_11, %c0_12], %14 {strides = array<i32>} : memref<8x256xf32, #tpu.memory_space<vmem>>, vector<8x256xf32>,
    } else {
    }
    %c0_1 = arith.constant 0 : index
    %c0_2 = arith.constant 0 : index
    %5 = vector.load %arg9[%c0_1, %c0_2] : memref<8x256xf32, #tpu.memory_space<vmem>>, vector<8x256xf32>
    %c0_3 = arith.constant 0 : index
    %c0_4 = arith.constant 0 : index
    %6 = vector.load %arg3[%c0_3, %c0_4] : memref<8x128xf32, #tpu.memory_space<vmem>>, vector<8x128xf32>
    %c0_5 = arith.constant 0 : index
    %c0_6 = arith.constant 0 : index
    %7 = vector.load %arg4[%c0_5, %c0_6] : memref<128x256xf32, #tpu.memory_space<vmem>>, vector<128x256xf32>
    %cst = arith.constant dense<0.000000e+00> : vector<8x256xf32>
    %8 = tpu.matmul %6, %7, %cst {dimension_numbers = #tpu.dot_dimension_numbers<[1], [0], [0], [1], [0, 0, 1, 1], [], []>} : vector<8x128xf32>, vector<128x256xf32>, vector<8x256xf32> -> vector<8x256xf32>
    %9 = arith.addf %5, %8 : vector<8x256xf32>
    %c0_7 = arith.constant 0 : index
    %c0_8 = arith.constant 0 : index
    %10 = vector.load %arg9[%c0_7, %c0_8] : memref<8x256xf32, #tpu.memory_space<vmem>>, vector<8x256xf32>
    tpu.vector_store %arg9[%c0_7, %c0_8], %9 {strides = array<i32>} : memref<8x256xf32, #tpu.memory_space<vmem>>, vector<8x256xf32>,
    %c2_i32 = arith.constant 2 : i32
    %11 = arith.cmpi eq, %arg1, %c2_i32 : i32
    %12 = arith.extui %11 : i1 to i32
    %c0_i32_9 = arith.constant 0 : i32
    %13 = arith.cmpi ne, %12, %c0_i32_9 : i32
    scf.if %13 {
      %c0_10 = arith.constant 0 : index
      %c0_11 = arith.constant 0 : index
      %14 = vector.load %arg9[%c0_10, %c0_11] : memref<8x256xf32, #tpu.memory_space<vmem>>, vector<8x256xf32>
      %c0_12 = arith.constant 0 : index
      %c0_13 = arith.constant 0 : index
      %15 = vector.load %arg5[%c0_12, %c0_13] : memref<1x256xf32, #tpu.memory_space<vmem>>, vector<1x256xf32>
      %16 = vector.broadcast %15 : vector<1x256xf32> to vector<8x256xf32>
      %17 = arith.addf %14, %16 : vector<8x256xf32>
      %cst_14 = arith.constant dense<0.000000e+00> : vector<256xf32>
      %18 = vector.multi_reduction <add>, %17, %cst_14 [0] : vector<8x256xf32> to vector<256xf32>
      %19 = vector.shape_cast %18 : vector<256xf32> to vector<1x256xf32>
      %cst_15 = arith.constant 8.000000e+00 : f32
      %20 = vector.broadcast %cst_15 : f32 to vector<1x256xf32>
      %21 = arith.divf %19, %20 : vector<1x256xf32>
      %22 = vector.broadcast %21 : vector<1x256xf32> to vector<8x256xf32>
      %23 = arith.subf %17, %22 : vector<8x256xf32>
      %24 = arith.mulf %23, %23 : vector<8x256xf32>
      %cst_16 = arith.constant dense<0.000000e+00> : vector<256xf32>
      %25 = vector.multi_reduction <add>, %24, %cst_16 [0] : vector<8x256xf32> to vector<256xf32>
      %26 = vector.shape_cast %25 : vector<256xf32> to vector<1x256xf32>
      %cst_17 = arith.constant 8.000000e+00 : f32
      %27 = vector.broadcast %cst_17 : f32 to vector<1x256xf32>
      %28 = arith.divf %26, %27 : vector<1x256xf32>
      %29 = vector.broadcast %21 : vector<1x256xf32> to vector<8x256xf32>
      %30 = arith.subf %17, %29 : vector<8x256xf32>
      %cst_18 = arith.constant 9.99999974E-6 : f32
      %31 = vector.broadcast %cst_18 : f32 to vector<1x256xf32>
      %32 = arith.addf %28, %31 : vector<1x256xf32>
      %33 = math.rsqrt %32 : vector<1x256xf32>
      %34 = vector.broadcast %33 : vector<1x256xf32> to vector<8x256xf32>
      %35 = arith.mulf %30, %34 : vector<8x256xf32>
      %c0_19 = arith.constant 0 : index
      %c0_20 = arith.constant 0 : index
      %36 = vector.load %arg6[%c0_19, %c0_20] : memref<1x256xf32, #tpu.memory_space<vmem>>, vector<1x256xf32>
      %37 = vector.broadcast %36 : vector<1x256xf32> to vector<8x256xf32>
      %38 = arith.mulf %35, %37 : vector<8x256xf32>
      %c0_21 = arith.constant 0 : index
      %c0_22 = arith.constant 0 : index
      %39 = vector.load %arg7[%c0_21, %c0_22] : memref<1x256xf32, #tpu.memory_space<vmem>>, vector<1x256xf32>
      %40 = vector.broadcast %39 : vector<1x256xf32> to vector<8x256xf32>
      %41 = arith.addf %38, %40 : vector<8x256xf32>
      %cst_23 = arith.constant 0.000000e+00 : f32
      %42 = vector.broadcast %cst_23 : f32 to vector<8x256xf32>
      %43 = arith.maximumf %41, %42 : vector<8x256xf32>
      %44 = tpu.iota {dimensions = array<i32: 0>} : vector<8x256xi32>
      %45 = tpu.iota {dimensions = array<i32: 1>} : vector<8x256xi32>
      %46 = vector.broadcast %0 : i32 to vector<8x256xi32>
      %47 = arith.addi %45, %46 : vector<8x256xi32>
      %c-1640531527_i32 = arith.constant -1640531527 : i32
      %48 = arith.muli %1, %c-1640531527_i32 : i32
      %c-2048144789_i32 = arith.constant -2048144789 : i32
      %49 = vector.broadcast %c-2048144789_i32 : i32 to vector<8x256xi32>
      %50 = arith.muli %44, %49 : vector<8x256xi32>
      %51 = vector.broadcast %48 : i32 to vector<8x256xi32>
      %52 = arith.xori %51, %50 : vector<8x256xi32>
      %c-1028477387_i32 = arith.constant -1028477387 : i32
      %53 = vector.broadcast %c-1028477387_i32 : i32 to vector<8x256xi32>
      %54 = arith.muli %47, %53 : vector<8x256xi32>
      %55 = arith.xori %52, %54 : vector<8x256xi32>
      %c16_i32 = arith.constant 16 : i32
      %56 = vector.broadcast %c16_i32 : i32 to vector<8x256xi32>
      %57 = arith.shrui %55, %56 : vector<8x256xi32>
      %58 = arith.xori %55, %57 : vector<8x256xi32>
      %c2146121005_i32 = arith.constant 2146121005 : i32
      %59 = vector.broadcast %c2146121005_i32 : i32 to vector<8x256xi32>
      %60 = arith.muli %58, %59 : vector<8x256xi32>
      %c15_i32 = arith.constant 15 : i32
      %61 = vector.broadcast %c15_i32 : i32 to vector<8x256xi32>
      %62 = arith.shrui %60, %61 : vector<8x256xi32>
      %63 = arith.xori %60, %62 : vector<8x256xi32>
      %c-2073254261_i32 = arith.constant -2073254261 : i32
      %64 = vector.broadcast %c-2073254261_i32 : i32 to vector<8x256xi32>
      %65 = arith.muli %63, %64 : vector<8x256xi32>
      %c16_i32_24 = arith.constant 16 : i32
      %66 = vector.broadcast %c16_i32_24 : i32 to vector<8x256xi32>
      %67 = arith.shrui %65, %66 : vector<8x256xi32>
      %68 = arith.xori %65, %67 : vector<8x256xi32>
      %c8_i32 = arith.constant 8 : i32
      %69 = vector.broadcast %c8_i32 : i32 to vector<8x256xi32>
      %70 = arith.shrui %68, %69 : vector<8x256xi32>
      %c8388608_i32 = arith.constant 8388608 : i32
      %71 = vector.broadcast %c8388608_i32 : i32 to vector<8x256xi32>
      %72 = arith.cmpi sge, %70, %71 : vector<8x256xi32>
      %cst_25 = arith.constant 2.000000e+00 : f32
      %73 = vector.broadcast %cst_25 : f32 to vector<8x256xf32>
      %74 = arith.mulf %43, %73 : vector<8x256xf32>
      %cst_26 = arith.constant 0.000000e+00 : f32
      %75 = vector.broadcast %cst_26 : f32 to vector<8x256xf32>
      %76 = arith.select %72, %74, %75 : vector<8x256xi1>, vector<8x256xf32>
      %c0_27 = arith.constant 0 : index
      %c0_28 = arith.constant 0 : index
      %77 = vector.load %arg8[%c0_27, %c0_28] : memref<8x256xf32, #tpu.memory_space<vmem>>, vector<8x256xf32>
      tpu.vector_store %arg8[%c0_27, %c0_28], %76 {strides = array<i32>} : memref<8x256xf32, #tpu.memory_space<vmem>>, vector<8x256xf32>,
    } else {
    }
    return
  }
  func.func @transform_0(%arg0: i32, %arg1: i32, %arg2: memref<1xi32, #tpu.memory_space<smem>>) -> (i32, i32) {
    %c0_i32 = arith.constant 0 : i32
    %c0_i32_0 = arith.constant 0 : i32
    return %c0_i32, %arg1 : i32, i32
  }
  func.func @transform_1(%arg0: i32, %arg1: i32, %arg2: memref<1xi32, #tpu.memory_space<smem>>) -> (i32, i32) {
    %c0_i32 = arith.constant 0 : i32
    return %arg1, %arg0 : i32, i32
  }
  func.func @transform_2(%arg0: i32, %arg1: i32, %arg2: memref<1xi32, #tpu.memory_space<smem>>) -> (i32, i32) {
    %c0_i32 = arith.constant 0 : i32
    %c0_i32_0 = arith.constant 0 : i32
    return %c0_i32, %arg0 : i32, i32
  }
  func.func @transform_3(%arg0: i32, %arg1: i32, %arg2: memref<1xi32, #tpu.memory_space<smem>>) -> (i32, i32) {
    %c0_i32 = arith.constant 0 : i32
    %c0_i32_0 = arith.constant 0 : i32
    return %c0_i32, %arg0 : i32, i32
  }
  func.func @transform_4(%arg0: i32, %arg1: i32, %arg2: memref<1xi32, #tpu.memory_space<smem>>) -> (i32, i32) {
    %c0_i32 = arith.constant 0 : i32
    %c0_i32_0 = arith.constant 0 : i32
    return %c0_i32, %arg0 : i32, i32
  }
  func.func @transform_5(%arg0: i32, %arg1: i32, %arg2: memref<1xi32, #tpu.memory_space<smem>>) -> (i32, i32) {
    %c0_i32 = arith.constant 0 : i32
    %c0_i32_0 = arith.constant 0 : i32
    return %c0_i32, %arg0 : i32, i32
  }
}

</mosaic_0001>

<llo_original>
// kernel: tpu_custom_call.1
$region0: #{tpu_custom_call.1}
  #allocation0 [shape = 'u32[]', space=smem, size = 0x4, offset = 0x4, fixed_abs, tag = 'smem constant byte address 0x4 - core index']
  #allocation1 [shape = 'u32[144,128]{1,0:T(1,128)}', space=vmem, size = 0x12000, scoped, tag = 'internal scratch']
  #allocation2 [shape = 'f32[8,256]{1,0:T(8,128)}', space=vmem, size = 0x2000, scoped, tag = 'scratch operand']
  #allocation3 [shape = 's32[1]{0}', space=sflag, size = 0x4, scoped, tag = 'scoped memory for tpu_custom_call.1']
  #allocation4 [shape = 's32[1]{0:T(128)S(6)}', space=smem, size = 0x200, scoped, tag = 'prefetched SMEM operand 0']
  %s0 = inlined_call_operand.<no memory space> [shape: s32[1], index: 0, kind: input, shape index: {}]
  %s1 = inlined_call_operand.hbm [shape: f32[8,384], index: 1, kind: input, shape index: {}]
  %s2 = inlined_call_operand.hbm [shape: f32[384,768], index: 2, kind: input, shape index: {}]
  %s3 = inlined_call_operand.hbm [shape: f32[1,768], index: 3, kind: input, shape index: {}]
  %s4 = inlined_call_operand.hbm [shape: f32[1,768], index: 4, kind: input, shape index: {}]
  %s5 = inlined_call_operand.hbm [shape: f32[1,768], index: 5, kind: input, shape index: {}]
  %s6 = inlined_call_operand.hbm [shape: f32[8,768], index: 6, kind: output, shape index: {}]
  %s7 = sld [smem:[#allocation0]]
  $region81: #{tpu_custom_call.1} parent=0
    _
  %s9 = ssub.s32 1, %s7
  %s10 = scalar_select 0, %s9, %s7
  %11 = sst [smem:[#allocation4]] %s0
  $region1: #{tpu_custom_call.1} parent=0
    #allocation5 [shape = 'u8[8192]{0}', space=vmem, size = 0x2000, scoped, tag = 'input window, operand 1']
    #allocation6 [shape = 's32[2]{0}', space=sflag, size = 0x8, scoped, tag = 'scoped memory for tpu_custom_call.1']
    #allocation7 [shape = 's32[2]{0}', space=sflag, size = 0x8, scoped, tag = 'scoped memory for tpu_custom_call.1']
    #allocation8 [shape = 'u8[262144]{0}', space=vmem, size = 0x40000, scoped, tag = 'input window, operand 2']
    #allocation9 [shape = 's32[2]{0}', space=sflag, size = 0x8, scoped, tag = 'scoped memory for tpu_custom_call.1']
    #allocation10 [shape = 'u8[2048]{0}', space=vmem, size = 0x800, scoped, tag = 'input window, operand 3']
    #allocation11 [shape = 'u8[2048]{0}', space=vmem, size = 0x800, scoped, tag = 'input window, operand 4']
    #allocation12 [shape = 's32[2]{0}', space=sflag, size = 0x8, scoped, tag = 'scoped memory for tpu_custom_call.1']
    #allocation13 [shape = 'u8[2048]{0}', space=vmem, size = 0x800, scoped, tag = 'input window, operand 5']
    #allocation14 [shape = 'u8[16384]{0}', space=vmem, size = 0x4000, scoped, tag = 'output window, operand 0']
    %12 = vsyncpa [#allocation6], 0
    %s13 = scalar_lea.sflag [#allocation6], 1
    %14 = vsyncpa %s13, 0
    %15 = vsyncpa [#allocation9], 0
    %s16 = scalar_lea.sflag [#allocation9], 1
    %17 = vsyncpa %s16, 0
    %18 = vsyncpa [#allocation12], 0
    %s19 = scalar_lea.sflag [#allocation12], 1
    %20 = vsyncpa %s19, 0
    %21 = vsyncpa [#allocation7], 0
    %s22 = scalar_lea.sflag [#allocation7], 1
    %23 = vsyncpa %s22, 0
    loop: start=0, step=1, limit=11
    $region2: #{tpu_custom_call.1} parent=1 // loop_pre_header
      _
    $region3: #{tpu_custom_call.1} parent=1 // loop_header
      %s25 = sphi 0, %s29
      %p26 = scmp.ge.s32.totalorder %s25, 11
      %s32 = sphi 0, %s44
      %s33 = sphi 0, %s40
      %s34 = sphi 0, %s32
      %s35 = sphi 0, %s33
      %s36 = sphi 0, %s34
      %s37 = sphi 0, %s35
      %s47 = sphi 0, %s49
      %s50 = sphi 0, %s47
      %s51 = sphi 0, %s50
      %s67 = sphi 0, %s51
      %s75 = sphi 0, %s77
      %s78 = sphi 0, %s75
      %s79 = sphi 0, %s78
      %s95 = sphi 0, %s79
      %s101 = sphi 0, %s103
      %s104 = sphi 0, %s101
      %s105 = sphi 0, %s104
      %s121 = sphi 0, %s105
      %s127 = sphi 0, %s129
      %s130 = sphi 0, %s127
      %s131 = sphi 0, %s130
      %s147 = sphi 0, %s131
      %s153 = sphi 0, %s155
      %s156 = sphi 0, %s153
      %s157 = sphi 0, %s156
      %s173 = sphi 0, %s157
      %s179 = sphi 0, %s181
      %s182 = sphi 0, %s179
      %s183 = sphi 0, %s182
      %s199 = sphi 0, %s183
    $region4: #{tpu_custom_call.1} parent=1 // loop_header_branch
      %28 = sbr.rel (%p26) target = $region8
    $region5: #{tpu_custom_call.1} parent=1 // loop_body
      %s30 = ssub.s32 %s25, 1
      %s31 = ssub.s32 %s25, 2
      %s38 = sadd.s32 1, %s33
      %p39 = scmp.ge.s32.totalorder %s38, 3
      %s40 = scalar_select %p39, 0, %s38
      %s41 = sadd.s32 1, %s32
      %s42 = scalar_select %p39, %s41, %s32
      %p43 = scmp.ge.s32.totalorder %s42, 3
      %s44 = scalar_select %p43, 0, %s42
      %s45 = ssub.s32 %s33, %s40
      %p46 = scmp.eq.s32.totalorder %s45, 0
      %s48 = sadd.s32 %s47, 1
      %s49 = scalar_select %p46, %s47, %s48
      %p52 = pneg %p46
      %p53 = scmp.eq.s32.totalorder %s25, 8
      %p54 = por %p52, %p53
      %p55 = scmp.ne.s32.totalorder %s47, %s50
      %p56 = scmp.eq.s32.totalorder %s25, 0
      %p57 = por %p55, %p56
      %p58 = scmp.ne.s32.totalorder %s47, %s50
      %p59 = scmp.eq.s32.totalorder %s30, 8
      %p60 = por %p58, %p59
      %p61 = scmp.ne.s32.totalorder %s50, %s51
      %p62 = scmp.eq.s32.totalorder %s30, 0
      %p63 = por %p61, %p62
      %p64 = scmp.ne.s32.totalorder %s50, %s51
      %p65 = scmp.eq.s32.totalorder %s31, 8
      %p66 = por %p64, %p65
      %p68 = scmp.ne.s32.totalorder %s51, %s67
      %p69 = scmp.eq.s32.totalorder %s31, 0
      %p70 = por %p68, %p69
      %s71 = ssub.s32 %s33, %s40
      %s72 = ssub.s32 %s32, %s44
      %s73 = sor.u32 %s71, %s72
      %p74 = scmp.eq.s32.totalorder %s73, 0
      %s76 = sadd.s32 %s75, 1
      %s77 = scalar_select %p74, %s75, %s76
      %p80 = pneg %p74
      %p81 = scmp.eq.s32.totalorder %s25, 8
      %p82 = por %p80, %p81
      %p83 = scmp.ne.s32.totalorder %s75, %s78
      %p84 = scmp.eq.s32.totalorder %s25, 0
      %p85 = por %p83, %p84
      %p86 = scmp.ne.s32.totalorder %s75, %s78
      %p87 = scmp.eq.s32.totalorder %s30, 8
      %p88 = por %p86, %p87
      %p89 = scmp.ne.s32.totalorder %s78, %s79
      %p90 = scmp.eq.s32.totalorder %s30, 0
      %p91 = por %p89, %p90
      %p92 = scmp.ne.s32.totalorder %s78, %s79
      %p93 = scmp.eq.s32.totalorder %s31, 8
      %p94 = por %p92, %p93
      %p96 = scmp.ne.s32.totalorder %s79, %s95
      %p97 = scmp.eq.s32.totalorder %s31, 0
      %p98 = por %p96, %p97
      %s99 = ssub.s32 %s32, %s44
      %p100 = scmp.eq.s32.totalorder %s99, 0
      %s102 = sadd.s32 %s101, 1
      %s103 = scalar_select %p100, %s101, %s102
      %p106 = pneg %p100
      %p107 = scmp.eq.s32.totalorder %s25, 8
      %p108 = por %p106, %p107
      %p109 = scmp.ne.s32.totalorder %s101, %s104
      %p110 = scmp.eq.s32.totalorder %s25, 0
      %p111 = por %p109, %p110
      %p112 = scmp.ne.s32.totalorder %s101, %s104
      %p113 = scmp.eq.s32.totalorder %s30, 8
      %p114 = por %p112, %p113
      %p115 = scmp.ne.s32.totalorder %s104, %s105
      %p116 = scmp.eq.s32.totalorder %s30, 0
      %p117 = por %p115, %p116
      %p118 = scmp.ne.s32.totalorder %s104, %s105
      %p119 = scmp.eq.s32.totalorder %s31, 8
      %p120 = por %p118, %p119
      %p122 = scmp.ne.s32.totalorder %s105, %s121
      %p123 = scmp.eq.s32.totalorder %s31, 0
      %p124 = por %p122, %p123
      %s125 = ssub.s32 %s32, %s44
      %p126 = scmp.eq.s32.totalorder %s125, 0
      %s128 = sadd.s32 %s127, 1
      %s129 = scalar_select %p126, %s127, %s128
      %p132 = pneg %p126
      %p133 = scmp.eq.s32.totalorder %s25, 8
      %p134 = por %p132, %p133
      %p135 = scmp.ne.s32.totalorder %s127, %s130
      %p136 = scmp.eq.s32.totalorder %s25, 0
      %p137 = por %p135, %p136
      %p138 = scmp.ne.s32.totalorder %s127, %s130
      %p139 = scmp.eq.s32.totalorder %s30, 8
      %p140 = por %p138, %p139
      %p141 = scmp.ne.s32.totalorder %s130, %s131
      %p142 = scmp.eq.s32.totalorder %s30, 0
      %p143 = por %p141, %p142
      %p144 = scmp.ne.s32.totalorder %s130, %s131
      %p145 = scmp.eq.s32.totalorder %s31, 8
      %p146 = por %p144, %p145
      %p148 = scmp.ne.s32.totalorder %s131, %s147
      %p149 = scmp.eq.s32.totalorder %s31, 0
      %p150 = por %p148, %p149
      %s151 = ssub.s32 %s32, %s44
      %p152 = scmp.eq.s32.totalorder %s151, 0
      %s154 = sadd.s32 %s153, 1
      %s155 = scalar_select %p152, %s153, %s154
      %p158 = pneg %p152
      %p159 = scmp.eq.s32.totalorder %s25, 8
      %p160 = por %p158, %p159
      %p161 = scmp.ne.s32.totalorder %s153, %s156
      %p162 = scmp.eq.s32.totalorder %s25, 0
      %p163 = por %p161, %p162
      %p164 = scmp.ne.s32.totalorder %s153, %s156
      %p165 = scmp.eq.s32.totalorder %s30, 8
      %p166 = por %p164, %p165
      %p167 = scmp.ne.s32.totalorder %s156, %s157
      %p168 = scmp.eq.s32.totalorder %s30, 0
      %p169 = por %p167, %p168
      %p170 = scmp.ne.s32.totalorder %s156, %s157
      %p171 = scmp.eq.s32.totalorder %s31, 8
      %p172 = por %p170, %p171
      %p174 = scmp.ne.s32.totalorder %s157, %s173
      %p175 = scmp.eq.s32.totalorder %s31, 0
      %p176 = por %p174, %p175
      %s177 = ssub.s32 %s32, %s44
      %p178 = scmp.eq.s32.totalorder %s177, 0
      %s180 = sadd.s32 %s179, 1
      %s181 = scalar_select %p178, %s179, %s180
      %p184 = pneg %p178
      %p185 = scmp.eq.s32.totalorder %s25, 8
      %p186 = por %p184, %p185
      %p187 = scmp.ne.s32.totalorder %s179, %s182
      %p188 = scmp.eq.s32.totalorder %s25, 0
      %p189 = por %p187, %p188
      %p190 = scmp.ne.s32.totalorder %s179, %s182
      %p191 = scmp.eq.s32.totalorder %s30, 8
      %p192 = por %p190, %p191
      %p193 = scmp.ne.s32.totalorder %s182, %s183
      %p194 = scmp.eq.s32.totalorder %s30, 0
      %p195 = por %p193, %p194
      %p196 = scmp.ne.s32.totalorder %s182, %s183
      %p197 = scmp.eq.s32.totalorder %s31, 8
      %p198 = por %p196, %p197
      %p200 = scmp.ne.s32.totalorder %s183, %s199
      %p201 = scmp.eq.s32.totalorder %s31, 0
      %p202 = por %p200, %p201
      %p203 = scmp.le.s32.totalorder 1, %s25
      %p204 = scmp.lt.s32.totalorder %s25, 10
      %p205 = pnand %p203, %p204
      %p206 = pneg %p205
      // Predicated region
      $region9: #{tpu_custom_call.1} parent=5 // pred_check
        _
      $region10: #{tpu_custom_call.1} parent=5 // pred_check_branch
        %208 = sbr.rel (%p205) target = $region12
      $region11: #{tpu_custom_call.1} parent=5 // pred_region
        %s209 = ssub.s32 %s25, 1
      $region12: #{tpu_custom_call.1} parent=5 // pred_fallthru
        _
      %p210 = scmp.lt.s32.totalorder %s25, 9
      // Predicated region
      $region13: #{tpu_custom_call.1} parent=5 // pred_check
        %p211 = pneg %p210
      $region14: #{tpu_custom_call.1} parent=5 // pred_check_branch
        %213 = sbr.rel (%p211) target = $region16
      $region15: #{tpu_custom_call.1} parent=5 // pred_region
        // Predicated region
        $region17: #{tpu_custom_call.1} parent=15 // pred_check
          %p214 = pneg %p57
        $region18: #{tpu_custom_call.1} parent=15 // pred_check_branch
          %216 = sbr.rel (%p214) target = $region20
        $region19: #{tpu_custom_call.1} parent=15 // pred_region
          %s217 = sand.u32 %s47, 1
          %s218 = scalar_lea.sflag [#allocation6], %s217
          %s219 = sand.u32 %s47, 1
          %s220 = smul.addr %s219, 8
          %s221 = scalar_lea.vmem [#allocation5], %s220
          %s223 = ssub.s32 128, 128
          %224 = vsyncadd %s218, %s223
          %s225 = smul.addr %s33, 128
          %s226 = scalar_lea.hbm %s1, %s225
          %s228 = sshll.u32 %s221, 4
          %s229 = int_to_ptr.vmem [resolvable:$true] %s228
          %231 = dma.hbm_to_vmem [thread:$0]  %s226, 128, %s229, %s218
        $region20: #{tpu_custom_call.1} parent=15 // pred_fallthru
          _
        // Predicated region
        $region21: #{tpu_custom_call.1} parent=15 // pred_check
          %p232 = pneg %p85
        $region22: #{tpu_custom_call.1} parent=15 // pred_check_branch
          %234 = sbr.rel (%p232) target = $region24
        $region23: #{tpu_custom_call.1} parent=15 // pred_region
          %s235 = sand.u32 %s25, 1
          %s236 = scalar_lea.sflag [#allocation9], %s235
          %s237 = sand.u32 %s75, 1
          %s238 = smul.addr %s237, 256
          %s239 = scalar_lea.vmem [#allocation8], %s238
          %s240 = smul.u32 16, %s33
          %s241 = smul.u32 2, %s32
          %s243 = ssub.s32 4096, 4096
          %244 = vsyncadd %s236, %s243
          %s245 = smul.addr %s240, 6
          %s246 = sadd.s32 %s241, %s245
          %s247 = smul.addr %s246, 128
          %s248 = scalar_lea.hbm %s2, %s247
          %s249 = sshll.u32 %s239, 4
          %s250 = int_to_ptr.vmem [resolvable:$true] %s249
          %255 = dma.hbm_to_vmem [thread:$0]  %s248, 4096, %s250, %s236, 768, 256, 16
        $region24: #{tpu_custom_call.1} parent=15 // pred_fallthru
          _
        // Predicated region
        $region25: #{tpu_custom_call.1} parent=15 // pred_check
          %p256 = pneg %p111
        $region26: #{tpu_custom_call.1} parent=15 // pred_check_branch
          %258 = sbr.rel (%p256) target = $region28
        $region27: #{tpu_custom_call.1} parent=15 // pred_region
          %s259 = sand.u32 %s25, 1
          %s260 = scalar_lea.sflag [#allocation9], %s259
          %s261 = sand.u32 %s101, 1
          %s262 = smul.addr %s261, 2
          %s263 = scalar_lea.vmem [#allocation10], %s262
          %s264 = smul.u32 2, %s32
          %s266 = ssub.s32 32, 32
          %267 = vsyncadd %s260, %s266
          %s268 = smul.addr %s264, 16
          %s269 = scalar_lea.hbm %s3, %s268
          %s271 = sshll.u32 %s263, 4
          %s272 = int_to_ptr.vmem [resolvable:$true] %s271
          %274 = dma.hbm_to_vmem [thread:$0]  %s269, 32, %s272, %s260
        $region28: #{tpu_custom_call.1} parent=15 // pred_fallthru
          _
        // Predicated region
        $region29: #{tpu_custom_call.1} parent=15 // pred_check
          %p275 = pneg %p137
        $region30: #{tpu_custom_call.1} parent=15 // pred_check_branch
          %277 = sbr.rel (%p275) target = $region32
        $region31: #{tpu_custom_call.1} parent=15 // pred_region
          %s278 = sand.u32 %s25, 1
          %s279 = scalar_lea.sflag [#allocation12], %s278
          %s280 = sand.u32 %s127, 1
          %s281 = smul.addr %s280, 2
          %s282 = scalar_lea.vmem [#allocation11], %s281
          %s283 = smul.u32 2, %s32
          %s285 = ssub.s32 32, 32
          %286 = vsyncadd %s279, %s285
          %s287 = smul.addr %s283, 16
          %s288 = scalar_lea.hbm %s4, %s287
          %s290 = sshll.u32 %s282, 4
          %s291 = int_to_ptr.vmem [resolvable:$true] %s290
          %293 = dma.hbm_to_vmem [thread:$0]  %s288, 32, %s291, %s279
        $region32: #{tpu_custom_call.1} parent=15 // pred_fallthru
          _
        // Predicated region
        $region33: #{tpu_custom_call.1} parent=15 // pred_check
          %p294 = pneg %p163
        $region34: #{tpu_custom_call.1} parent=15 // pred_check_branch
          %296 = sbr.rel (%p294) target = $region36
        $region35: #{tpu_custom_call.1} parent=15 // pred_region
          %s297 = sand.u32 %s25, 1
          %s298 = scalar_lea.sflag [#allocation12], %s297
          %s299 = sand.u32 %s153, 1
          %s300 = smul.addr %s299, 2
          %s301 = scalar_lea.vmem [#allocation13], %s300
          %s302 = smul.u32 2, %s32
          %s304 = ssub.s32 32, 32
          %305 = vsyncadd %s298, %s304
          %s306 = smul.addr %s302, 16
          %s307 = scalar_lea.hbm %s5, %s306
          %s309 = sshll.u32 %s301, 4
          %s310 = int_to_ptr.vmem [resolvable:$true] %s309
          %312 = dma.hbm_to_vmem [thread:$0]  %s307, 32, %s310, %s298
        $region36: #{tpu_custom_call.1} parent=15 // pred_fallthru
          _
      $region16: #{tpu_custom_call.1} parent=5 // pred_fallthru
        _
      %p313 = scmp.le.s32.totalorder 1, %s25
      %p314 = scmp.lt.s32.totalorder %s25, 10
      %p315 = pnand %p313, %p314
      %p316 = pneg %p315
      // Predicated region
      $region37: #{tpu_custom_call.1} parent=5 // pred_check
        _
      $region38: #{tpu_custom_call.1} parent=5 // pred_check_branch
        %318 = sbr.rel (%p315) target = $region40
      $region39: #{tpu_custom_call.1} parent=5 // pred_region
        %s319 = ssub.s32 %s25, 1
        %s320 = sand.u32 %s50, 1
        %s321 = scalar_lea.sflag [#allocation6], %s320
        %s322 = sand.u32 %s50, 1
        %s323 = smul.addr %s322, 8
        %s324 = scalar_lea.vmem [#allocation5], %s323
        // Predicated region
        $region41: #{tpu_custom_call.1} parent=39 // pred_check
          %p325 = pneg %p63
        $region42: #{tpu_custom_call.1} parent=39 // pred_check_branch
          %327 = sbr.rel (%p325) target = $region44
        $region43: #{tpu_custom_call.1} parent=39 // pred_region
          %328 = dma.done %s321, 128
        $region44: #{tpu_custom_call.1} parent=39 // pred_fallthru
          _
        %s329 = sand.u32 %s30, 1
        %s330 = scalar_lea.sflag [#allocation9], %s329
        %s331 = sand.u32 %s78, 1
        %s332 = smul.addr %s331, 256
        %s333 = scalar_lea.vmem [#allocation8], %s332
        // Predicated region
        $region45: #{tpu_custom_call.1} parent=39 // pred_check
          %p334 = pneg %p91
        $region46: #{tpu_custom_call.1} parent=39 // pred_check_branch
          %336 = sbr.rel (%p334) target = $region48
        $region47: #{tpu_custom_call.1} parent=39 // pred_region
          %337 = dma.done %s330, 4096
        $region48: #{tpu_custom_call.1} parent=39 // pred_fallthru
          _
        %s338 = sand.u32 %s30, 1
        %s339 = scalar_lea.sflag [#allocation9], %s338
        %s340 = sand.u32 %s104, 1
        %s341 = smul.addr %s340, 2
        %s342 = scalar_lea.vmem [#allocation10], %s341
        // Predicated region
        $region49: #{tpu_custom_call.1} parent=39 // pred_check
          %p343 = pneg %p117
        $region50: #{tpu_custom_call.1} parent=39 // pred_check_branch
          %345 = sbr.rel (%p343) target = $region52
        $region51: #{tpu_custom_call.1} parent=39 // pred_region
          %346 = dma.done %s339, 32
        $region52: #{tpu_custom_call.1} parent=39 // pred_fallthru
          _
        %s347 = sand.u32 %s30, 1
        %s348 = scalar_lea.sflag [#allocation12], %s347
        %s349 = sand.u32 %s130, 1
        %s350 = smul.addr %s349, 2
        %s351 = scalar_lea.vmem [#allocation11], %s350
        // Predicated region
        $region53: #{tpu_custom_call.1} parent=39 // pred_check
          %p352 = pneg %p143
        $region54: #{tpu_custom_call.1} parent=39 // pred_check_branch
          %354 = sbr.rel (%p352) target = $region56
        $region55: #{tpu_custom_call.1} parent=39 // pred_region
          %355 = dma.done %s348, 32
        $region56: #{tpu_custom_call.1} parent=39 // pred_fallthru
          _
        %s356 = sand.u32 %s30, 1
        %s357 = scalar_lea.sflag [#allocation12], %s356
        %s358 = sand.u32 %s156, 1
        %s359 = smul.addr %s358, 2
        %s360 = scalar_lea.vmem [#allocation13], %s359
        // Predicated region
        $region57: #{tpu_custom_call.1} parent=39 // pred_check
          %p361 = pneg %p169
        $region58: #{tpu_custom_call.1} parent=39 // pred_check_branch
          %363 = sbr.rel (%p361) target = $region60
        $region59: #{tpu_custom_call.1} parent=39 // pred_region
          %364 = dma.done %s357, 32
        $region60: #{tpu_custom_call.1} parent=39 // pred_fallthru
          _
        %s365 = sand.u32 %s50, 1
        %s366 = scalar_lea.sflag [#allocation6], %s365
        %s367 = sand.u32 %s50, 1
        %s368 = smul.addr %s367, 8
        %s369 = scalar_lea.vmem [#allocation5], %s368
        %p370 = pneg %p63
        %p371 = pneg %p60
        %s372 = sand.u32 %s30, 1
        %s373 = scalar_lea.sflag [#allocation9], %s372
        %s374 = sand.u32 %s78, 1
        %s375 = smul.addr %s374, 256
        %s376 = scalar_lea.vmem [#allocation8], %s375
        %p377 = pneg %p91
        %p378 = pneg %p88
        %s379 = sand.u32 %s30, 1
        %s380 = scalar_lea.sflag [#allocation9], %s379
        %s381 = sand.u32 %s104, 1
        %s382 = smul.addr %s381, 2
        %s383 = scalar_lea.vmem [#allocation10], %s382
        %p384 = pneg %p117
        %p385 = pneg %p114
        %s386 = sand.u32 %s30, 1
        %s387 = scalar_lea.sflag [#allocation12], %s386
        %s388 = sand.u32 %s130, 1
        %s389 = smul.addr %s388, 2
        %s390 = scalar_lea.vmem [#allocation11], %s389
        %p391 = pneg %p143
        %p392 = pneg %p140
        %s393 = sand.u32 %s30, 1
        %s394 = scalar_lea.sflag [#allocation12], %s393
        %s395 = sand.u32 %s156, 1
        %s396 = smul.addr %s395, 2
        %s397 = scalar_lea.vmem [#allocation13], %s396
        %p398 = pneg %p169
        %p399 = pneg %p166
        %p400 = pneg %p195
        %p401 = pneg %p192
        %s402 = sand.u32 %s182, 1
        %s403 = scalar_lea.sflag [#allocation7], %s402
        %s404 = sand.u32 %s182, 1
        %s405 = smul.addr %s404, 16
        %s406 = scalar_lea.vmem [#allocation14], %s405
        %s407 = smul.u32 16, %s35
        %s408 = smul.u32 2, %s34
        %s409 = smul.u32 2, %s34
        %s410 = smul.u32 2, %s34
        %s411 = smul.u32 2, %s34
        %s412 = smul.u32 2, %s34
        %s413 = smul.u32 %s34, 256
        %s414 = sld [smem:[#allocation4]]
        %p415 = scmp.eq.s32.totalorder %s35, 0
        // Predicated region
        $region61: #{tpu_custom_call.1} parent=39 // pred_check
          %p416 = pneg %p415
        $region62: #{tpu_custom_call.1} parent=39 // pred_check_branch
          %418 = sbr.rel (%p416) target = $region64
        $region63: #{tpu_custom_call.1} parent=39 // pred_region
          %419 = vst [vmem:[#allocation2] sm:$0xff] 0.0
          %420 = vst [vmem:[#allocation2 + $0x8] sm:$0xff] 0.0
        $region64: #{tpu_custom_call.1} parent=39 // pred_fallthru
          _
        %v421 = vld [vmem:[#allocation2] sm:$0xff]
        %v422 = vld [vmem:[#allocation2 + $0x8] sm:$0xff]
        %v423 = vld [vmem:[%s324] sm:$0xff]
        %v424 = vld [vmem:[%s333] sm:$0xff]
        %v425 = vld [vmem:[%s333 + $0x8] sm:$0xff]
        %v426 = vld [vmem:[%s333 + $0x10] sm:$0xff]
        %v427 = vld [vmem:[%s333 + $0x18] sm:$0xff]
        %v428 = vld [vmem:[%s333 + $0x20] sm:$0xff]
        %v429 = vld [vmem:[%s333 + $0x28] sm:$0xff]
        %v430 = vld [vmem:[%s333 + $0x30] sm:$0xff]
        %v431 = vld [vmem:[%s333 + $0x38] sm:$0xff]
        %v432 = vld [vmem:[%s333 + $0x40] sm:$0xff]
        %v433 = vld [vmem:[%s333 + $0x48] sm:$0xff]
        %v434 = vld [vmem:[%s333 + $0x50] sm:$0xff]
        %v435 = vld [vmem:[%s333 + $0x58] sm:$0xff]
        %v436 = vld [vmem:[%s333 + $0x60] sm:$0xff]
        %v437 = vld [vmem:[%s333 + $0x68] sm:$0xff]
        %v438 = vld [vmem:[%s333 + $0x70] sm:$0xff]
        %v439 = vld [vmem:[%s333 + $0x78] sm:$0xff]
        %v440 = vld [vmem:[%s333 + $0x80] sm:$0xff]
        %v441 = vld [vmem:[%s333 + $0x88] sm:$0xff]
        %v442 = vld [vmem:[%s333 + $0x90] sm:$0xff]
        %v443 = vld [vmem:[%s333 + $0x98] sm:$0xff]
        %v444 = vld [vmem:[%s333 + $0xa0] sm:$0xff]
        %v445 = vld [vmem:[%s333 + $0xa8] sm:$0xff]
        %v446 = vld [vmem:[%s333 + $0xb0] sm:$0xff]
        %v447 = vld [vmem:[%s333 + $0xb8] sm:$0xff]
        %v448 = vld [vmem:[%s333 + $0xc0] sm:$0xff]
        %v449 = vld [vmem:[%s333 + $0xc8] sm:$0xff]
        %v450 = vld [vmem:[%s333 + $0xd0] sm:$0xff]
        %v451 = vld [vmem:[%s333 + $0xd8] sm:$0xff]
        %v452 = vld [vmem:[%s333 + $0xe0] sm:$0xff]
        %v453 = vld [vmem:[%s333 + $0xe8] sm:$0xff]
        %v454 = vld [vmem:[%s333 + $0xf0] sm:$0xff]
        %v455 = vld [vmem:[%s333 + $0xf8] sm:$0xff]
        %456 = vmatprep.subr.mxu0 %v425
        %457 = vmatpush1.msra.mxu0 %v424
        %458 = vmatprep.subr.mxu0 %v427
        %459 = vmatpush1.msra.mxu0 %v426
        %460 = vmatprep.subr.mxu0 %v429
        %461 = vmatpush1.msra.mxu0 %v428
        %462 = vmatprep.subr.mxu0 %v431
        %463 = vmatpush1.msra.mxu0 %v430
        %464 = vmatprep.subr.mxu0 %v433
        %465 = vmatpush1.msra.mxu0 %v432
        %466 = vmatprep.subr.mxu0 %v435
        %467 = vmatpush1.msra.mxu0 %v434
        %468 = vmatprep.subr.mxu0 %v437
        %469 = vmatpush1.msra.mxu0 %v436
        %470 = vmatprep.subr.mxu0 %v439
        %471 = vmatpush1.msra.mxu0 %v438
        %472 = vmatprep.subr.mxu0 %v441
        %473 = vmatpush1.msra.mxu0 %v440
        %474 = vmatprep.subr.mxu0 %v443
        %475 = vmatpush1.msra.mxu0 %v442
        %476 = vmatprep.subr.mxu0 %v445
        %477 = vmatpush1.msra.mxu0 %v444
        %478 = vmatprep.subr.mxu0 %v447
        %479 = vmatpush1.msra.mxu0 %v446
        %480 = vmatprep.subr.mxu0 %v449
        %481 = vmatpush1.msra.mxu0 %v448
        %482 = vmatprep.subr.mxu0 %v451
        %483 = vmatpush1.msra.mxu0 %v450
        %484 = vmatprep.subr.mxu0 %v453
        %485 = vmatpush1.msra.mxu0 %v452
        %486 = vmatprep.subr.mxu0 %v455
        %487 = vmatpush1.msra.mxu0 %v454
        %488 = vmatprep.subr.mxu0 0.0
        %489 = vmatpush1.msra.mxu0 0.0
        %490 = vmatprep.subr.mxu0 0.0
        %491 = vmatpush1.msra.mxu0 0.0
        %492 = vmatprep.subr.mxu0 0.0
        %493 = vmatpush1.msra.mxu0 0.0
        %494 = vmatprep.subr.mxu0 0.0
        %495 = vmatpush1.msra.mxu0 0.0
        %496 = vmatprep.subr.mxu0 0.0
        %497 = vmatpush1.msra.mxu0 0.0
        %498 = vmatprep.subr.mxu0 0.0
        %499 = vmatpush1.msra.mxu0 0.0
        %500 = vmatprep.subr.mxu0 0.0
        %501 = vmatpush1.msra.mxu0 0.0
        %502 = vmatprep.subr.mxu0 0.0
        %503 = vmatpush1.msra.mxu0 0.0
        %504 = vmatprep.subr.mxu0 0.0
        %505 = vmatpush1.msra.mxu0 0.0
        %506 = vmatprep.subr.mxu0 0.0
        %507 = vmatpush1.msra.mxu0 0.0
        %508 = vmatprep.subr.mxu0 0.0
        %509 = vmatpush1.msra.mxu0 0.0
        %510 = vmatprep.subr.mxu0 0.0
        %511 = vmatpush1.msra.mxu0 0.0
        %512 = vmatprep.subr.mxu0 0.0
        %513 = vmatpush1.msra.mxu0 0.0
        %514 = vmatprep.subr.mxu0 0.0
        %515 = vmatpush1.msra.mxu0 0.0
        %516 = vmatprep.subr.mxu0 0.0
        %517 = vmatpush1.msra.mxu0 0.0
        %518 = vmatprep.subr.mxu0 0.0
        %519 = vmatpush1.msra.mxu0 0.0
        %520 = vmatprep.mubr.f32.mxu0 0.0
        %521 = vmatmul.mubr.f32.gmra.mrb[0].mxu0 %v423
        %v522 = vpop.f32.mrb[0].mxu0
        %v523 = vadd.f32 0.0, %v522
        %v524 = vpop.f32.mrb[0].mxu0
        %v525 = vadd.f32 0.0, %v524
        %526 = vdwg.mxu0
        %v527 = vadd.f32 %v421, %v523
        %v528 = vadd.f32 %v422, %v525
        %529 = vst [vmem:[#allocation2] sm:$0xff] %v527
        %530 = vst [vmem:[#allocation2 + $0x8] sm:$0xff] %v528
        %p531 = scmp.eq.s32.totalorder %s35, 2
        // Predicated region
        $region65: #{tpu_custom_call.1} parent=39 // pred_check
          %p532 = pneg %p531
        $region66: #{tpu_custom_call.1} parent=39 // pred_check_branch
          %534 = sbr.rel (%p532) target = $region68
        $region67: #{tpu_custom_call.1} parent=39 // pred_region
          %v535 = vld [vmem:[#allocation2] sm:$0xff]
          %v536 = vld [vmem:[#allocation2 + $0x8] sm:$0xff]
          %v537 = vld [vmem:[%s342] sm:$0x3]
          %v539 = vlaneseq
          %v540 = vshrl.u32 %v539, 7
          %v541 = vsub.s32 0, %v540
          %v542 = vrot.slane %v537, %v541
          %v543 = vlaneseq
          %v544 = vshrl.u32 %v543, 7
          %v545 = vsub.s32 1, %v544
          %v546 = vrot.slane %v537, %v545
          %v549 = vadd.f32 %v535, %v542
          %v550 = vadd.f32 %v536, %v546
          %v551 = vrot.slane %v549, 4
          %v552 = vadd.f32 %v549, %v551
          %v553 = vrot.slane %v552, 2
          %v554 = vadd.f32 %v552, %v553
          %v555 = vrot.slane %v554, 1
          %v556 = vadd.f32 %v554, %v555
          %v557 = vrot.slane %v550, 4
          %v558 = vadd.f32 %v550, %v557
          %v559 = vrot.slane %v558, 2
          %v560 = vadd.f32 %v558, %v559
          %v561 = vrot.slane %v560, 1
          %v562 = vadd.f32 %v560, %v561
          %v563 = vrcp.pop 8.0
          %v564 = vmul.f32 %v556, %v563
          %v565 = vmul.f32 %v562, %v563
          %v566 = vsub.f32 %v549, %v564
          %v567 = vsub.f32 %v550, %v565
          %v568 = vmul.f32 %v566, %v566
          %v569 = vmul.f32 %v567, %v567
          %v570 = vrot.slane %v568, 4
          %v571 = vadd.f32 %v568, %v570
          %v572 = vrot.slane %v571, 2
          %v573 = vadd.f32 %v571, %v572
          %v574 = vrot.slane %v573, 1
          %v575 = vadd.f32 %v573, %v574
          %v576 = vrot.slane %v569, 4
          %v577 = vadd.f32 %v569, %v576
          %v578 = vrot.slane %v577, 2
          %v579 = vadd.f32 %v577, %v578
          %v580 = vrot.slane %v579, 1
          %v581 = vadd.f32 %v579, %v580
          %v582 = vmul.f32 %v575, %v563
          %v583 = vmul.f32 %v581, %v563
          %v584 = vadd.f32 %v582, 1e-05
          %v585 = vadd.f32 %v583, 1e-05
          %v586 = vrsqrt.pop %v584
          %v587 = vrsqrt.pop %v585
          %v588 = vmul.f32 %v566, %v586
          %v589 = vmul.f32 %v567, %v587
          %v590 = vld [vmem:[%s351] sm:$0x3]
          %v592 = vlaneseq
          %v593 = vshrl.u32 %v592, 7
          %v594 = vsub.s32 0, %v593
          %v595 = vrot.slane %v590, %v594
          %v596 = vlaneseq
          %v597 = vshrl.u32 %v596, 7
          %v598 = vsub.s32 1, %v597
          %v599 = vrot.slane %v590, %v598
          %v602 = vmul.f32 %v588, %v595
          %v603 = vmul.f32 %v589, %v599
          %v604 = vld [vmem:[%s360] sm:$0x3]
          %v606 = vlaneseq
          %v607 = vshrl.u32 %v606, 7
          %v608 = vsub.s32 0, %v607
          %v609 = vrot.slane %v604, %v608
          %v610 = vlaneseq
          %v611 = vshrl.u32 %v610, 7
          %v612 = vsub.s32 1, %v611
          %v613 = vrot.slane %v604, %v612
          %v616 = vadd.f32 %v602, %v609
          %v617 = vadd.f32 %v603, %v613
          %v618 = vmax.f32 %v616, 0.0
          %v619 = vmax.f32 %v617, 0.0
          %v620 = vlaneseq
          %v621 = vshrl.u32 %v620, 7
          %v622 = vlaneseq
          %v623 = vand.u32 %v622, 127
          %v624 = vadd.s32 %v623, 128
          %v625 = vstv %s413
          %v626 = vadd.s32 %v623, %v625
          %v627 = vadd.s32 %v624, %v625
          %s628 = smul.u32 %s414, 2654435769
          %v629 = vmul.u32 %v621, 2246822507
          %v630 = vstv %s628
          %v631 = vxor.u32 %v630, %v629
          %v632 = vmul.u32 %v626, 3266489909
          %v633 = vmul.u32 %v627, 3266489909
          %v634 = vxor.u32 %v631, %v632
          %v635 = vxor.u32 %v631, %v633
          %v636 = vshrl.u32 %v634, 16
          %v637 = vshrl.u32 %v635, 16
          %v638 = vxor.u32 %v634, %v636
          %v639 = vxor.u32 %v635, %v637
          %v640 = vmul.u32 %v638, 2146121005
          %v641 = vmul.u32 %v639, 2146121005
          %v642 = vshrl.u32 %v640, 15
          %v643 = vshrl.u32 %v641, 15
          %v644 = vxor.u32 %v640, %v642
          %v645 = vxor.u32 %v641, %v643
          %v646 = vmul.u32 %v644, 2221713035
          %v647 = vmul.u32 %v645, 2221713035
          %v648 = vshrl.u32 %v646, 16
          %v649 = vshrl.u32 %v647, 16
          %v650 = vxor.u32 %v646, %v648
          %v651 = vxor.u32 %v647, %v649
          %v652 = vshrl.u32 %v650, 8
          %v653 = vshrl.u32 %v651, 8
          %vm654 = vcmp.ge.s32.totalorder %v652, 8388608
          %vm655 = vcmp.ge.s32.totalorder %v653, 8388608
          %v656 = vmul.f32 %v618, 2.0
          %v657 = vmul.f32 %v619, 2.0
          %v658 = vsel %vm654, %v656, 0.0
          %v659 = vsel %vm655, %v657, 0.0
          %660 = vst [vmem:[%s406] sm:$0xff] %v658
          %661 = vst [vmem:[%s406 + $0x8] sm:$0xff] %v659
        $region68: #{tpu_custom_call.1} parent=39 // pred_fallthru
          _
        %s662 = sand.u32 %s182, 1
        %s663 = scalar_lea.sflag [#allocation7], %s662
        %s664 = sand.u32 %s182, 1
        %s665 = smul.addr %s664, 16
        %s666 = scalar_lea.vmem [#allocation14], %s665
        // Predicated region
        $region69: #{tpu_custom_call.1} parent=39 // pred_check
          %p667 = pneg %p192
        $region70: #{tpu_custom_call.1} parent=39 // pred_check_branch
          %669 = sbr.rel (%p667) target = $region72
        $region71: #{tpu_custom_call.1} parent=39 // pred_region
          %s670 = smul.u32 2, %s34
          %s672 = ssub.s32 256, 256
          %673 = vsyncadd %s663, %s672
          %s674 = smul.addr %s670, 128
          %s675 = scalar_lea.hbm %s6, %s674
          %s677 = sshll.u32 %s666, 4
          %s678 = int_to_ptr.vmem [resolvable:$true] %s677
          %680 = dma.vmem_to_hbm [thread:$0]  %s678, 256, %s675, %s663
        $region72: #{tpu_custom_call.1} parent=39 // pred_fallthru
          _
      $region40: #{tpu_custom_call.1} parent=5 // pred_fallthru
        _
      %p681 = scmp.le.s32.totalorder 2, %s25
      // Predicated region
      $region73: #{tpu_custom_call.1} parent=5 // pred_check
        %p682 = pneg %p681
      $region74: #{tpu_custom_call.1} parent=5 // pred_check_branch
        %684 = sbr.rel (%p682) target = $region76
      $region75: #{tpu_custom_call.1} parent=5 // pred_region
        %s685 = ssub.s32 %s25, 2
        // Predicated region
        $region77: #{tpu_custom_call.1} parent=75 // pred_check
          %p686 = pneg %p198
        $region78: #{tpu_custom_call.1} parent=75 // pred_check_branch
          %688 = sbr.rel (%p686) target = $region80
        $region79: #{tpu_custom_call.1} parent=75 // pred_region
          %s689 = sand.u32 %s183, 1
          %s690 = scalar_lea.sflag [#allocation7], %s689
          %s691 = sand.u32 %s183, 1
          %s692 = smul.addr %s691, 16
          %s693 = scalar_lea.vmem [#allocation14], %s692
          %694 = dma.done %s690, 256
        $region80: #{tpu_custom_call.1} parent=75 // pred_fallthru
          _
      $region76: #{tpu_custom_call.1} parent=5 // pred_fallthru
        _
    $region6: #{tpu_custom_call.1} parent=1 // loop_footer
      %s29 = sadd.s32 1, %s25
    $region7: #{tpu_custom_call.1} parent=1 // loop_footer_branch
      %24 = sbr.rel target = $region3
    $region8: #{tpu_custom_call.1} parent=1 // loop_exit
      _
    %695 = vsyncpa [#allocation6], 1
    %s696 = scalar_lea.sflag [#allocation6], 1
    %697 = vsyncpa %s696, 1
    %698 = vsyncpa [#allocation9], 1
    %s699 = scalar_lea.sflag [#allocation9], 1
    %700 = vsyncpa %s699, 1
    %701 = vsyncpa [#allocation12], 1
    %s702 = scalar_lea.sflag [#allocation12], 1
    %703 = vsyncpa %s702, 1
    %704 = vsyncpa [#allocation7], 1
    %s705 = scalar_lea.sflag [#allocation7], 1
    %706 = vsyncpa %s705, 1

</llo_original>
